<compile_context>
chip_gen: v7x
topology: tpu7x:2x2x1
jax: 0.10.0
libtpu: 0.0.40
codegen_flags: <defaults>
</compile_context>

<pallas_src>
import functools

import jax
import jax.numpy as jnp
from jax import lax
from jax.experimental import pallas as pl
from jax.experimental.pallas import tpu as pltpu

LANES = 128
BLOCK_ROWS = 4096                    # 4096 x 128 f32 = 2 MiB per input block
FAST_PATH_BYTES = 4 * 1024 * 1024    # single-pass VMEM-resident fast path


def _fused_small_kernel(x_ref, o_ref, *, inv_n):
    """Whole tensor resident in VMEM: sum + relu(x) - mean in one pass."""
    xf = x_ref[...].astype(jnp.float32)
    mean = jnp.sum(xf) * inv_n
    o_ref[...] = (jnp.maximum(xf, 0.0) - mean).astype(o_ref.dtype)


def _partial_sum_kernel(x_ref, p_ref, *, block_rows, rows, masked):
    """Pass 1: per-tile partial sum written into this tile's (8,128) slab."""
    xf = x_ref[...].astype(jnp.float32)
    if masked:
        # Last tile may overrun the array; zero out-of-bounds rows so garbage
        # reads do not pollute the sum.
        r0 = pl.program_id(0) * block_rows
        ridx = lax.broadcasted_iota(jnp.int32, xf.shape, 0) + r0
        xf = jnp.where(ridx < rows, xf, 0.0)
    s = jnp.sum(xf)
    # Scatter the scalar into slot [0, 0] of the tile's (8,128) partial slab
    # (zeros elsewhere) so the host-side jnp.sum over all partials is exact.
    sub = lax.broadcasted_iota(jnp.int32, (8, LANES), 0)
    lane = lax.broadcasted_iota(jnp.int32, (8, LANES), 1)
    p_ref[...] = jnp.where((sub == 0) & (lane == 0), s, 0.0)


def _apply_kernel(sum_ref, x_ref, o_ref, *, inv_n):
    """Pass 2: out = relu(x) - sum/n; f32 compute, cast on final store."""
    mean = sum_ref[0] * inv_n            # scalar lives in SMEM
    xf = x_ref[...].astype(jnp.float32)
    o_ref[...] = (jnp.maximum(xf, 0.0) - mean).astype(o_ref.dtype)


def _wibrelu_small(x2d, inv_n):
    rows, _ = x2d.shape
    return pl.pallas_call(
        functools.partial(_fused_small_kernel, inv_n=inv_n),
        out_shape=jax.ShapeDtypeStruct(x2d.shape, x2d.dtype),
        grid=(1,),
        in_specs=[pl.BlockSpec((rows, LANES), lambda i: (0, 0))],
        out_specs=pl.BlockSpec((rows, LANES), lambda i: (0, 0)),
    )(x2d)


def _wibrelu_large(x2d, inv_n):
    rows, _ = x2d.shape
    block_rows = min(BLOCK_ROWS, ((rows + 7) // 8) * 8)
    num_tiles = pl.cdiv(rows, block_rows)
    masked = (rows % block_rows) != 0

    # Pass 1: parallel per-tile partial sums (no serial accumulator, so a v7x
    # megacore can shard the grid across both TensorCores; neutral on v5e/v6e).
    partials = pl.pallas_call(
        functools.partial(_partial_sum_kernel, block_rows=block_rows,
                          rows=rows, masked=masked),
        out_shape=jax.ShapeDtypeStruct((num_tiles * 8, LANES), jnp.float32),
        grid=(num_tiles,),
        in_specs=[pl.BlockSpec((block_rows, LANES), lambda i: (i, 0))],
        out_specs=pl.BlockSpec((8, LANES), lambda i: (i, 0)),
        compiler_params=pltpu.CompilerParams(
            dimension_semantics=("parallel",)),
    )(x2d)

    # Tiny reduction of the partial slabs (num_tiles * 4 KiB).
    total = jnp.sum(partials).reshape(1).astype(jnp.float32)

    # Pass 2: elementwise relu(x) - mean; raw sum delivered via SMEM, 1/n is a
    # compile-time constant folded into the kernel.
    out2d = pl.pallas_call(
        functools.partial(_apply_kernel, inv_n=inv_n),
        out_shape=jax.ShapeDtypeStruct(x2d.shape, x2d.dtype),
        grid=(num_tiles,),
        in_specs=[
            pl.BlockSpec(memory_space=pltpu.MemorySpace.SMEM),
            pl.BlockSpec((block_rows, LANES), lambda i: (i, 0)),
        ],
        out_specs=pl.BlockSpec((block_rows, LANES), lambda i: (i, 0)),
        compiler_params=pltpu.CompilerParams(
            dimension_semantics=("parallel",)),
    )(total, x2d)
    return out2d


def wib_relu(x):
    """out = relu(x) - mean(x), with mean taken over every element of x."""
    orig_shape = x.shape
    n = x.size
    inv_n = 1.0 / float(n)

    flat = x.reshape(-1)                 # layout-preserving, no HBM round-trip
    pad = (-n) % LANES
    if pad:
        # Rare ragged case (numel not a multiple of 128): a flat buffer cannot
        # be reshaped into a (rows, 128) slab without a small zero-pad. Zeros
        # contribute 0 to the sum; we still divide by the true n and strip the
        # pad afterwards. The common conv case (numel % 128 == 0) is copy-free.
        flat = jnp.pad(flat, (0, pad))
    x2d = flat.reshape(-1, LANES)

    if x2d.size * x2d.dtype.itemsize <= FAST_PATH_BYTES:
        out2d = _wibrelu_small(x2d, inv_n)
    else:
        out2d = _wibrelu_large(x2d, inv_n)

    out = out2d.reshape(-1)
    if pad:
        out = out[:n]
    return out.reshape(orig_shape)


if __name__ == "__main__":
    key = jax.random.PRNGKey(0)
    fn = jax.jit(wib_relu)

    # Small NCHW activation (hits the fused single-pass fast path).
    x_small = jax.random.normal(key, (2, 4, 16, 16), dtype=jnp.float32)
    out_small = jax.block_until_ready(fn(x_small))
    ref_small = jnp.maximum(x_small, 0.0) - jnp.mean(x_small)
    assert out_small.shape == x_small.shape and out_small.dtype == x_small.dtype
    assert jnp.allclose(out_small, ref_small, atol=1e-5, rtol=1e-5)

    # Larger activation: exercises the two-pass tiled path, including the
    # masked ragged last tile of pass 1.
    x_large = jax.random.normal(key, (8, 64, 64, 65), dtype=jnp.float32)
    out_large = jax.block_until_ready(fn(x_large))
    ref_large = jnp.maximum(x_large, 0.0) - jnp.mean(x_large)
    assert out_large.shape == x_large.shape and out_large.dtype == x_large.dtype
    assert jnp.allclose(out_large, ref_large, atol=1e-5, rtol=1e-5)

    print("KERNEL_OK")
</pallas_src>

<mosaic_0001>
module attributes {stable_mosaic.version = 11 : i64} {
  func.func @_fused_small_kernel(%arg0: i32, %arg1: memref<16x128xf32, #tpu.memory_space<vmem>>, %arg2: memref<16x128xf32, #tpu.memory_space<vmem>>) attributes {dimension_semantics = [#tpu.dimension_semantics<arbitrary>], iteration_bounds = array<i64: 1>, scalar_prefetch = 0 : i64, scratch_operands = 0 : i64, tpu.core_type = #tpu.core_type<tc>, window_params = [{pipeline_mode = #tpu.pipeline_mode<synchronous>, transform_indices = @transform_0, window_bounds = array<i64: 16, 128>}, {pipeline_mode = #tpu.pipeline_mode<synchronous>, transform_indices = @transform_1, window_bounds = array<i64: 16, 128>}]} {
    %c0 = arith.constant 0 : index
    %c0_0 = arith.constant 0 : index
    %0 = vector.load %arg1[%c0, %c0_0] : memref<16x128xf32, #tpu.memory_space<vmem>>, vector<16x128xf32>
    %1 = vector.shape_cast %0 : vector<16x128xf32> to vector<1x16x128xf32>
    %cst = arith.constant dense<0.000000e+00> : vector<1xf32>
    %2 = vector.multi_reduction <add>, %1, %cst [1, 2] : vector<1x16x128xf32> to vector<1xf32>
    %3 = vector.shape_cast %2 : vector<1xf32> to vector<1x1x1xf32>
    %4 = vector.extract %3[0, 0, 0] : f32 from vector<1x1x1xf32>
    %cst_1 = arith.constant 4.8828125E-4 : f32
    %5 = arith.mulf %4, %cst_1 : f32
    %cst_2 = arith.constant 0.000000e+00 : f32
    %6 = vector.broadcast %cst_2 : f32 to vector<16x128xf32>
    %7 = arith.maximumf %0, %6 : vector<16x128xf32>
    %8 = vector.broadcast %5 : f32 to vector<16x128xf32>
    %9 = arith.subf %7, %8 : vector<16x128xf32>
    %c0_3 = arith.constant 0 : index
    %c0_4 = arith.constant 0 : index
    %10 = vector.load %arg2[%c0_3, %c0_4] : memref<16x128xf32, #tpu.memory_space<vmem>>, vector<16x128xf32>
    tpu.vector_store %arg2[%c0_3, %c0_4], %9 {strides = array<i32>} : memref<16x128xf32, #tpu.memory_space<vmem>>, vector<16x128xf32>,
    return
  }
  func.func @transform_0(%arg0: i32) -> (i32, i32) {
    %c0_i32 = arith.constant 0 : i32
    %c0_i32_0 = arith.constant 0 : i32
    %c0_i32_1 = arith.constant 0 : i32
    return %c0_i32, %c0_i32_0 : i32, i32
  }
  func.func @transform_1(%arg0: i32) -> (i32, i32) {
    %c0_i32 = arith.constant 0 : i32
    %c0_i32_0 = arith.constant 0 : i32
    %c0_i32_1 = arith.constant 0 : i32
    return %c0_i32, %c0_i32_0 : i32, i32
  }
}

</mosaic_0001>

<llo_original>
// kernel: wib_relu.1
$region0: #{wib_relu.1}
  #allocation0 [shape = 'u32[]', space=smem, size = 0x4, offset = 0x4, fixed_abs, tag = 'smem constant byte address 0x4 - core index']
  #allocation1 [shape = 'u32[144,128]{1,0:T(1,128)}', space=vmem, size = 0x12000, scoped, tag = 'internal scratch']
  %s0 = inlined_call_operand.vmem [shape: f32[16,128], index: 0, kind: input, shape index: {}]
  %s1 = inlined_call_operand.vmem [shape: f32[16,128], index: 1, kind: output, shape index: {}]
  %s2 = sld [smem:[#allocation0]]
  $region14: #{wib_relu.1} parent=0
    _
  %s4 = ssub.s32 1, %s2
  %s5 = scalar_select 0, %s4, %s2
  // Predicated region
  $region2: #{wib_relu.1} parent=0 // pred_check
    _
  $region3: #{wib_relu.1} parent=0 // pred_check_branch
    %7 = sbr.rel (0) target = $region5
  $region4: #{wib_relu.1} parent=0 // pred_region
    _
  $region5: #{wib_relu.1} parent=0 // pred_fallthru
    _
  %v8 = vld [vmem:[%s0] sm:$0xff]
  %v9 = vld [vmem:[%s0 + $0x8] sm:$0xff]
  %v10 = vadd.f32 %v8, %v9
  %11 = vadd.xlane.f32.xlu0 %v10
  %v12 = vpop.xlane.xlu0 %11
  %v13 = vrot.slane %v12, 4
  %v14 = vadd.f32 %v12, %v13
  %v15 = vrot.slane %v14, 2
  %v16 = vadd.f32 %v14, %v15
  %v17 = vrot.slane %v16, 1
  %v18 = vadd.f32 %v16, %v17
  %s19 = vtos %v18
  %s20 = smul.f32 %s19, 0.00048828125
  %v21 = vmax.f32 %v8, 0.0
  %v22 = vmax.f32 %v9, 0.0
  %v23 = vstv %s20
  %v24 = vsub.f32 %v21, %v23
  %v25 = vsub.f32 %v22, %v23
  %26 = vst [vmem:[%s1] sm:$0xff] %v24
  %27 = vst [vmem:[%s1 + $0x8] sm:$0xff] %v25
  // Predicated region
  $region6: #{wib_relu.1} parent=0 // pred_check
    _
  $region7: #{wib_relu.1} parent=0 // pred_check_branch
    %29 = sbr.rel (0) target = $region9
  $region8: #{wib_relu.1} parent=0 // pred_region
    _
  $region9: #{wib_relu.1} parent=0 // pred_fallthru
    _
  // Predicated region
  $region10: #{wib_relu.1} parent=0 // pred_check
    _
  $region11: #{wib_relu.1} parent=0 // pred_check_branch
    %31 = sbr.rel (0) target = $region13
  $region12: #{wib_relu.1} parent=0 // pred_region
    _
  $region13: #{wib_relu.1} parent=0 // pred_fallthru
    _

</llo_original>
